<compile_context>
chip_gen: v7x
topology: tpu7x:2x2x1
jax: 0.10.0
libtpu: 0.0.40
codegen_flags: <defaults>
</compile_context>

<pallas_src>
import jax
import jax.numpy as jnp
from jax.experimental import pallas as pl
from jax.experimental.pallas import tpu as pltpu

_LANES = 128
_TARGET_TILE_BYTES = 2 * 1024 * 1024  # ~2 MiB: past the roofline knee, safe on v5e/v6e/v7x


def _copy_kernel(x_ref, o_ref):
    # Identity copy of the current (block_rows, cols) tile.
    o_ref[...] = x_ref[...]


def _sublane_pack(itemsize: int) -> int:
    # f32 -> 8, bf16/f16 -> 16, int8/fp8 -> 32 (sub-32-bit dtypes pack along sublanes).
    return max(8, 8 * (4 // max(1, itemsize)))


def _choose_2d_layout(numel: int, itemsize: int):
    """Pick a lane-dense (rows, cols) slab and a legal, large block_rows.

    Returns (rows, cols, block_rows) or None if numel is not lane-divisible.
    """
    cols = 0
    for cand in (4096, 2048, 1024, 512, 256, 128):  # wide lane dim first
        if numel % cand == 0:
            cols = cand
            break
    if cols == 0:
        return None
    rows = numel // cols
    pack = _sublane_pack(itemsize)

    if rows % pack != 0:
        # Full-extent block along rows: always legal (equals the full dim),
        # never a masked sub-(8,128) tile.
        return rows, cols, rows

    # Largest multiple of `pack` that divides rows and keeps the tile under
    # the target byte budget (at least one packed vreg worth of rows).
    max_rows_by_budget = max(pack, (_TARGET_TILE_BYTES // (cols * itemsize)) // pack * pack)
    block_rows = pack
    r = pack
    limit = min(rows, max_rows_by_budget)
    while r <= limit:
        if rows % r == 0:
            block_rows = r
        r += pack
    return rows, cols, block_rows


def _pallas_identity_2d(x2d: jax.Array, block_rows: int) -> jax.Array:
    rows, cols = x2d.shape
    assert rows % block_rows == 0 and cols % _LANES == 0
    itemsize = jnp.dtype(x2d.dtype).itemsize
    tile_bytes = block_rows * cols * itemsize
    # Double-buffered input + double-buffered output ≈ 4 x tile_bytes live.
    vmem_limit = int(min(100 * 1024 * 1024, max(16 * 1024 * 1024, 6 * tile_bytes)))
    numel_bytes = rows * cols * itemsize

    return pl.pallas_call(
        _copy_kernel,
        out_shape=jax.ShapeDtypeStruct((rows, cols), x2d.dtype),
        grid_spec=pltpu.PrefetchScalarGridSpec(
            num_scalar_prefetch=0,
            grid=(rows // block_rows,),
            in_specs=[pl.BlockSpec((block_rows, cols), lambda i: (i, 0))],
            out_specs=pl.BlockSpec((block_rows, cols), lambda i: (i, 0)),
        ),
        compiler_params=pltpu.CompilerParams(
            dimension_semantics=("parallel",),  # shards grid across TCs on v7x
            vmem_limit_bytes=vmem_limit,
        ),
        cost_estimate=pl.CostEstimate(
            flops=0, transcendentals=0, bytes_accessed=2 * numel_bytes
        ),
    )(x2d)


def _resolve_view_shape(numel: int, args) -> tuple:
    """Replicate torch.view's -1 inference."""
    args = tuple(int(a) for a in args)
    if args.count(-1) > 1:
        raise ValueError("only one dimension can be inferred")
    if -1 in args:
        known = 1
        for a in args:
            if a != -1:
                known *= a
        if known == 0 or numel % known != 0:
            raise ValueError(f"shape {args} is invalid for input of size {numel}")
        args = tuple(numel // known if a == -1 else a for a in args)
    prod = 1
    for a in args:
        prod *= a
    if prod != numel:
        raise ValueError(f"shape {args} is invalid for input of size {numel}")
    return args


class View:
    """JAX/Pallas equivalent of the PyTorch `View` module.

    Default path is metadata-only (jnp.reshape), matching torch.view's
    zero-copy semantics.  Pass materialize=True to force a fresh buffer via
    the Pallas identity-copy kernel.
    Note: unlike torch.view this never errors on "non-contiguous" inputs —
    JAX arrays are logically contiguous (intentional semantic difference).
    """

    def __init__(self, *args, materialize: bool = False):
        self.args = args
        self.materialize = materialize

    def __call__(self, x: jax.Array) -> jax.Array:
        numel = x.size
        target = _resolve_view_shape(numel, self.args)

        if not self.materialize or numel == 0:
            # torch.view is metadata-only; so is this.
            return jnp.reshape(x, target)

        itemsize = jnp.dtype(x.dtype).itemsize
        layout = _choose_2d_layout(numel, itemsize)
        if layout is None:
            # TODO(synk): ragged (non-lane-divisible) tail via padded slab + masked stores.
            return jnp.reshape(x, target)
        rows, cols, block_rows = layout
        x2d = jnp.reshape(x, (rows, cols))
        y2d = _pallas_identity_2d(x2d, block_rows)
        return jnp.reshape(y2d, target)


if __name__ == "__main__":
    key = jax.random.PRNGKey(0)
    # Small NCHW-style input consistent with typical use of View in conv nets.
    x = jax.random.normal(key, (2, 4, 16, 16), dtype=jnp.float32)

    # 1) Default (zero-copy) path: View(2, -1).
    y = jax.block_until_ready(View(2, -1)(x))
    ref = jnp.reshape(x, (2, -1))
    assert y.shape == (2, 4 * 16 * 16) and y.dtype == x.dtype
    assert bool(jnp.all(y == ref))

    # 2) Materializing Pallas copy path, f32.
    y_mat = jax.block_until_ready(View(2, -1, materialize=True)(x))
    assert y_mat.shape == (2, 4 * 16 * 16) and y_mat.dtype == x.dtype
    assert bool(jnp.all(y_mat == ref))

    # 3) Fully specified target shape through the Pallas path.
    y2 = jax.block_until_ready(View(8, 16, 16, materialize=True)(x))
    assert y2.shape == (8, 16, 16)
    assert bool(jnp.all(y2 == jnp.reshape(x, (8, 16, 16))))

    # 4) Dtype-aware sublane packing: bf16 through the Pallas path.
    x_bf16 = x.astype(jnp.bfloat16)
    y_bf16 = jax.block_until_ready(View(-1, 64, materialize=True)(x_bf16))
    assert y_bf16.shape == (32, 64) and y_bf16.dtype == jnp.bfloat16
    assert bool(jnp.all(y_bf16 == jnp.reshape(x_bf16, (32, 64))))

    print("KERNEL_OK")
</pallas_src>

<mosaic_0001>
module attributes {stable_mosaic.version = 11 : i64} {
  func.func @_copy_kernel(%arg0: i32, %arg1: memref<1x2048xf32, #tpu.memory_space<vmem>>, %arg2: memref<1x2048xf32, #tpu.memory_space<vmem>>) attributes {dimension_semantics = [#tpu.dimension_semantics<parallel>], iteration_bounds = array<i64: 1>, scalar_prefetch = 0 : i64, scratch_operands = 0 : i64, tpu.core_type = #tpu.core_type<tc>, window_params = [{transform_indices = @transform_0, window_bounds = array<i64: 1, 2048>}, {transform_indices = @transform_1, window_bounds = array<i64: 1, 2048>}]} {
    %c0 = arith.constant 0 : index
    %c0_0 = arith.constant 0 : index
    %0 = vector.load %arg1[%c0, %c0_0] : memref<1x2048xf32, #tpu.memory_space<vmem>>, vector<1x2048xf32>
    %c0_1 = arith.constant 0 : index
    %c0_2 = arith.constant 0 : index
    %1 = vector.load %arg2[%c0_1, %c0_2] : memref<1x2048xf32, #tpu.memory_space<vmem>>, vector<1x2048xf32>
    tpu.vector_store %arg2[%c0_1, %c0_2], %0 {strides = array<i32>} : memref<1x2048xf32, #tpu.memory_space<vmem>>, vector<1x2048xf32>,
    return
  }
  func.func @transform_0(%arg0: i32) -> (i32, i32) {
    %c0_i32 = arith.constant 0 : i32
    %c0_i32_0 = arith.constant 0 : i32
    return %arg0, %c0_i32 : i32, i32
  }
  func.func @transform_1(%arg0: i32) -> (i32, i32) {
    %c0_i32 = arith.constant 0 : i32
    %c0_i32_0 = arith.constant 0 : i32
    return %arg0, %c0_i32 : i32, i32
  }
}

</mosaic_0001>

<llo_original>
// kernel: tpu_custom_call.1
$region0: #{tpu_custom_call.1}
  #allocation0 [shape = 'u32[]', space=smem, size = 0x4, offset = 0x4, fixed_abs, tag = 'smem constant byte address 0x4 - core index']
  #allocation1 [shape = 'u32[144,128]{1,0:T(1,128)}', space=vmem, size = 0x12000, scoped, tag = 'internal scratch']
  %s0 = inlined_call_operand.hbm [shape: f32[1,2048], index: 0, kind: input, shape index: {}]
  %s1 = inlined_call_operand.hbm [shape: f32[1,2048], index: 1, kind: output, shape index: {}]
  %s2 = sld [smem:[#allocation0]]
  $region18: #{tpu_custom_call.1} parent=0
    _
  %s4 = ssub.s32 1, %s2
  %s5 = scalar_select 0, %s4, %s2
  $region1: #{tpu_custom_call.1} parent=0
    #allocation2 [shape = 'u8[8192]{0}', space=vmem, size = 0x2000, scoped, tag = 'input window, operand 0, single buffered']
    #allocation3 [shape = 's32[1]{0}', space=sflag, size = 0x4, scoped, tag = 'scoped memory for tpu_custom_call.1']
    #allocation4 [shape = 's32[1]{0}', space=sflag, size = 0x4, scoped, tag = 'scoped memory for tpu_custom_call.1']
    #allocation5 [shape = 'u8[8192]{0}', space=vmem, size = 0x2000, scoped, tag = 'output window, operand 0, single buffered']
    %6 = vsyncpa [#allocation3], 0
    %7 = vsyncpa [#allocation4], 0
    // Predicated region
    $region2: #{tpu_custom_call.1} parent=1 // pred_check
      _
    $region3: #{tpu_custom_call.1} parent=1 // pred_check_branch
      %9 = sbr.rel (0) target = $region5
    $region4: #{tpu_custom_call.1} parent=1 // pred_region
      %s11 = ssub.s32 256, 256
      %12 = vsyncadd [#allocation3], %s11
      %s14 = sshll.u32 [#allocation2], 4
      %s15 = int_to_ptr.vmem [resolvable:$true] %s14
      %17 = dma.hbm_to_vmem [thread:$0]  %s0, 256, %s15, [#allocation3]
    $region5: #{tpu_custom_call.1} parent=1 // pred_fallthru
      _
    // Predicated region
    $region6: #{tpu_custom_call.1} parent=1 // pred_check
      _
    $region7: #{tpu_custom_call.1} parent=1 // pred_check_branch
      %19 = sbr.rel (0) target = $region9
    $region8: #{tpu_custom_call.1} parent=1 // pred_region
      %20 = dma.done [#allocation3], 256
    $region9: #{tpu_custom_call.1} parent=1 // pred_fallthru
      _
    %v21 = vld [vmem:[#allocation2] sm:$0xff]
    %v22 = vld [vmem:[#allocation2 + $0x8] sm:$0xff]
    %23 = vst [vmem:[#allocation5] sm:$0xff] %v21
    %24 = vst [vmem:[#allocation5 + $0x8] sm:$0xff] %v22
    // Predicated region
    $region10: #{tpu_custom_call.1} parent=1 // pred_check
      _
    $region11: #{tpu_custom_call.1} parent=1 // pred_check_branch
      %26 = sbr.rel (0) target = $region13
    $region12: #{tpu_custom_call.1} parent=1 // pred_region
      %s28 = ssub.s32 256, 256
      %29 = vsyncadd [#allocation4], %s28
      %s31 = sshll.u32 [#allocation5], 4
      %s32 = int_to_ptr.vmem [resolvable:$true] %s31
      %34 = dma.vmem_to_hbm [thread:$0]  %s32, 256, %s1, [#allocation4]
    $region13: #{tpu_custom_call.1} parent=1 // pred_fallthru
      _
    // Predicated region
    $region14: #{tpu_custom_call.1} parent=1 // pred_check
      _
    $region15: #{tpu_custom_call.1} parent=1 // pred_check_branch
      %36 = sbr.rel (0) target = $region17
    $region16: #{tpu_custom_call.1} parent=1 // pred_region
      %37 = dma.done [#allocation4], 256
    $region17: #{tpu_custom_call.1} parent=1 // pred_fallthru
      _
    %38 = vsyncpa [#allocation3], 1
    %39 = vsyncpa [#allocation4], 1

</llo_original>
